<compile_context>
chip_gen: v7x
topology: tpu7x:2x2x1
jax: 0.10.0
libtpu: 0.0.40
codegen_flags: <defaults>
</compile_context>

<pallas_src>
import jax
import jax.numpy as jnp
from jax.experimental import pallas as pl
from jax.experimental.pallas import tpu as pltpu

LANE = 128
SUBLANE = 8
MXU_M = 256  # v6e/v7x MXU row depth; preferred M alignment


def _round_up(n, m):
    return ((n + m - 1) // m) * m


def _qram_kernel(x_ref,
                 w1_ref, b1_ref,
                 w2_ref, b2_ref,
                 w3_ref, b3_ref,
                 w4_ref, b4_ref,
                 o_ref):
    """Fused forward: relu(x@W1+b1) -> relu(@W2+b2) -> relu(@W3+b3) -> @W4+b4."""
    k_in = x_ref.shape[1]

    # ---- Layer 1: tiny contraction (K = in_features = 4) on the VPU ---------
    # Static-unrolled broadcast-FMAs; no materialized (TB, 256) bias broadcast.
    x = x_ref[...].astype(jnp.float32)                  # (TB, K)
    w1 = w1_ref[...]                                    # (K, 256) f32
    h1 = x[:, 0:1] * w1[0:1, :]                         # (TB, 256)
    for k in range(1, k_in):                            # static unroll
        h1 = h1 + x[:, k:k + 1] * w1[k:k + 1, :]
    h1 = jnp.maximum(h1 + b1_ref[...], 0.0)             # implicit (1,256) bcast

    # ---- Layers 2-4: bf16 MXU matmuls, f32 accumulation, f32 bias/ReLU ------
    h2 = jnp.dot(h1.astype(jnp.bfloat16), w2_ref[...],
                 preferred_element_type=jnp.float32) + b2_ref[...]
    h2 = jnp.maximum(h2, 0.0)

    h3 = jnp.dot(h2.astype(jnp.bfloat16), w3_ref[...],
                 preferred_element_type=jnp.float32) + b3_ref[...]
    h3 = jnp.maximum(h3, 0.0)

    h4 = jnp.dot(h3.astype(jnp.bfloat16), w4_ref[...],
                 preferred_element_type=jnp.float32) + b4_ref[...]

    o_ref[...] = h4.astype(o_ref.dtype)


def _choose_batch_tiling(B, block_b):
    """Pick (tb, b_pad) balancing per-step overhead, MXU fill and padding."""
    # Minimum number of grid steps at the TB cap.
    n = -(-B // block_b)
    # v7x: keep >= 2 grid steps so both TensorCores get work under
    # dimension_semantics=("parallel",).  No-op cost on 1-TC chips (v5e/v6e).
    if n < 2 and B >= 2 * MXU_M:
        n = 2
    tb = -(-B // n)
    # Alignment: prefer 256 (fills v6e/v7x MXU rows), then 128 (v5e MXU),
    # then sublane 8 — but only if the alignment does not blow up padding.
    for a in (MXU_M, LANE, SUBLANE):
        cand = _round_up(tb, a)
        if a == SUBLANE or cand - tb <= max(tb // 8, SUBLANE):
            tb = cand
            break
    b_pad = _round_up(B, tb)
    return tb, b_pad


def _vmem_limit_bytes(tb, f_in, out_pad, kparams):
    """Generous scoped-VMEM estimate (double-buffered I/O + intermediates)."""
    io = 2 * tb * (f_in + out_pad) * 4                       # x / out tiles, x2 buffers
    inter = tb * (2 * 256 + 3 * LANE + out_pad) * 4          # h1..h4 + bf16 casts
    wts = 2 * sum(int(a.size) * a.dtype.itemsize for a in kparams.values())
    est = io + inter + wts
    # At least the v6e/v7x default (32 MiB, harmless on v5e whose physical VMEM
    # is 128 MiB); capped well under v7x's 64 MiB physical VMEM.
    return int(min(48 << 20, max(32 << 20, 2 * est)))


def discrete_qram_forward(x, kparams, num_actions, *, block_b=1024):
    """x: (B, in_features) float32. kparams: output of prepare_params()."""
    B, f_in = x.shape
    out_pad = kparams["w4"].shape[1]

    tb, b_pad = _choose_batch_tiling(B, block_b)
    if b_pad != B:
        x = jnp.pad(x, ((0, b_pad - B), (0, 0)))

    def const_spec(a):
        # Full-shape block, constant index map -> weights stay VMEM-resident
        # across batch-grid steps (no re-DMA).
        return pl.BlockSpec(a.shape, lambda i: tuple(0 for _ in a.shape))

    out = pl.pallas_call(
        _qram_kernel,
        out_shape=jax.ShapeDtypeStruct((b_pad, out_pad), jnp.float32),
        grid=(b_pad // tb,),
        in_specs=[
            pl.BlockSpec((tb, f_in), lambda i: (i, 0)),
            const_spec(kparams["w1"]), const_spec(kparams["b1"]),
            const_spec(kparams["w2"]), const_spec(kparams["b2"]),
            const_spec(kparams["w3"]), const_spec(kparams["b3"]),
            const_spec(kparams["w4"]), const_spec(kparams["b4"]),
        ],
        out_specs=pl.BlockSpec((tb, out_pad), lambda i: (i, 0)),
        compiler_params=pltpu.CompilerParams(
            dimension_semantics=("parallel",),
            vmem_limit_bytes=_vmem_limit_bytes(tb, f_in, out_pad, kparams)),
    )(x,
      kparams["w1"], kparams["b1"],
      kparams["w2"], kparams["b2"],
      kparams["w3"], kparams["b3"],
      kparams["w4"], kparams["b4"])

    return out[:B, :num_actions]


def init_params(key, in_features=4, num_actions=18):
    """Logical (unpadded, f32) params mimicking nn.Linear's U(-1/sqrt(fan_in), ..).

    Weights stored as (in, out) — PyTorch W.T — so forward is x @ W + b.
    Biases stored as (1, out) to stay 2D for TPU layout.
    """
    dims = [(in_features, 256), (256, 128), (128, 64), (64, num_actions)]
    params = {}
    for i, (fan_in, fan_out) in enumerate(dims, start=1):
        key, kw, kb = jax.random.split(key, 3)
        bound = 1.0 / jnp.sqrt(jnp.float32(fan_in))
        params[f"w{i}"] = jax.random.uniform(
            kw, (fan_in, fan_out), jnp.float32, -bound, bound)
        params[f"b{i}"] = jax.random.uniform(
            kb, (1, fan_out), jnp.float32, -bound, bound)
    return params


def prepare_params(params, num_actions):
    """Pad to lane-dense widths and cast MXU-layer weights to bf16."""
    h3_pad = LANE                                        # 64 -> 128
    out_pad = _round_up(max(num_actions, LANE), LANE)    # 18 -> 128

    w3, b3 = params["w3"], params["b3"]                  # (128, 64), (1, 64)
    w4, b4 = params["w4"], params["b4"]                  # (64, A),   (1, A)

    w3p = jnp.pad(w3, ((0, 0), (0, h3_pad - w3.shape[1])))
    b3p = jnp.pad(b3, ((0, 0), (0, h3_pad - b3.shape[1])))
    w4p = jnp.pad(w4, ((0, h3_pad - w4.shape[0]), (0, out_pad - w4.shape[1])))
    b4p = jnp.pad(b4, ((0, 0), (0, out_pad - b4.shape[1])))

    return {
        "w1": params["w1"].astype(jnp.float32),   # used on the VPU; tiny, stays f32
        "b1": params["b1"].astype(jnp.float32),
        "w2": params["w2"].astype(jnp.bfloat16),
        "b2": params["b2"].astype(jnp.float32),
        "w3": w3p.astype(jnp.bfloat16),
        "b3": b3p.astype(jnp.float32),
        "w4": w4p.astype(jnp.bfloat16),
        "b4": b4p.astype(jnp.float32),
    }


def reference_forward(x, params):
    """Plain-JAX f32 reference matching the PyTorch forward."""
    h = jnp.maximum(x @ params["w1"] + params["b1"], 0.0)
    h = jnp.maximum(h @ params["w2"] + params["b2"], 0.0)
    h = jnp.maximum(h @ params["w3"] + params["b3"], 0.0)
    return h @ params["w4"] + params["b4"]


if __name__ == "__main__":
    key = jax.random.PRNGKey(0)
    key, kx1, kx2 = jax.random.split(key, 3)

    in_features = 4
    num_actions = 18

    params = init_params(key, in_features=in_features, num_actions=num_actions)
    kparams = prepare_params(params, num_actions)

    # Small serving-style batch (single grid step).
    batch = 8
    x = jax.random.normal(kx1, (batch, in_features), jnp.float32)
    out = jax.block_until_ready(discrete_qram_forward(x, kparams, num_actions))
    ref = reference_forward(x, params)
    assert out.shape == (batch, num_actions)
    assert jnp.allclose(out, ref, atol=1e-2, rtol=1e-2), (
        float(jnp.max(jnp.abs(out - ref))))

    # Larger awkward batch: exercises >=2 grid steps (v7x sharding) and the
    # low-padding tile selection.
    batch2 = 600
    x2 = jax.random.normal(kx2, (batch2, in_features), jnp.float32)
    out2 = jax.block_until_ready(discrete_qram_forward(x2, kparams, num_actions))
    ref2 = reference_forward(x2, params)
    assert out2.shape == (batch2, num_actions)
    assert jnp.allclose(out2, ref2, atol=1e-2, rtol=1e-2), (
        float(jnp.max(jnp.abs(out2 - ref2))))

    print("KERNEL_OK")
</pallas_src>

<mosaic_0001>
module attributes {stable_mosaic.version = 11 : i64} {
  func.func @_qram_kernel(%arg0: i32, %arg1: memref<8x4xf32, #tpu.memory_space<vmem>>, %arg2: memref<4x256xf32, #tpu.memory_space<vmem>>, %arg3: memref<1x256xf32, #tpu.memory_space<vmem>>, %arg4: memref<256x128xbf16, #tpu.memory_space<vmem>>, %arg5: memref<1x128xf32, #tpu.memory_space<vmem>>, %arg6: memref<128x128xbf16, #tpu.memory_space<vmem>>, %arg7: memref<1x128xf32, #tpu.memory_space<vmem>>, %arg8: memref<128x128xbf16, #tpu.memory_space<vmem>>, %arg9: memref<1x128xf32, #tpu.memory_space<vmem>>, %arg10: memref<8x128xf32, #tpu.memory_space<vmem>>) attributes {dimension_semantics = [#tpu.dimension_semantics<parallel>], iteration_bounds = array<i64: 1>, scalar_prefetch = 0 : i64, scratch_operands = 0 : i64, tpu.core_type = #tpu.core_type<tc>, window_params = [{transform_indices = @transform_0, window_bounds = array<i64: 8, 4>}, {pipeline_mode = #tpu.pipeline_mode<synchronous>, transform_indices = @transform_1, window_bounds = array<i64: 4, 256>}, {pipeline_mode = #tpu.pipeline_mode<synchronous>, transform_indices = @transform_2, window_bounds = array<i64: 1, 256>}, {pipeline_mode = #tpu.pipeline_mode<synchronous>, transform_indices = @transform_3, window_bounds = array<i64: 256, 128>}, {pipeline_mode = #tpu.pipeline_mode<synchronous>, transform_indices = @transform_4, window_bounds = array<i64: 1, 128>}, {pipeline_mode = #tpu.pipeline_mode<synchronous>, transform_indices = @transform_5, window_bounds = array<i64: 128, 128>}, {pipeline_mode = #tpu.pipeline_mode<synchronous>, transform_indices = @transform_6, window_bounds = array<i64: 1, 128>}, {pipeline_mode = #tpu.pipeline_mode<synchronous>, transform_indices = @transform_7, window_bounds = array<i64: 128, 128>}, {pipeline_mode = #tpu.pipeline_mode<synchronous>, transform_indices = @transform_8, window_bounds = array<i64: 1, 128>}, {transform_indices = @transform_9, window_bounds = array<i64: 8, 128>}]} {
    %c0 = arith.constant 0 : index
    %c0_0 = arith.constant 0 : index
    %0 = vector.load %arg1[%c0, %c0_0] : memref<8x4xf32, #tpu.memory_space<vmem>>, vector<8x4xf32>
    %c0_1 = arith.constant 0 : index
    %c0_2 = arith.constant 0 : index
    %1 = vector.load %arg2[%c0_1, %c0_2] : memref<4x256xf32, #tpu.memory_space<vmem>>, vector<4x256xf32>
    %2 = vector.extract_strided_slice %0 {offsets = [0, 0], sizes = [8, 1], strides = [1, 1]} : vector<8x4xf32> to vector<8x1xf32>
    %3 = vector.extract_strided_slice %1 {offsets = [0, 0], sizes = [1, 256], strides = [1, 1]} : vector<4x256xf32> to vector<1x256xf32>
    %4 = vector.broadcast %2 : vector<8x1xf32> to vector<8x256xf32>
    %5 = vector.broadcast %3 : vector<1x256xf32> to vector<8x256xf32>
    %6 = arith.mulf %4, %5 : vector<8x256xf32>
    %7 = vector.extract_strided_slice %0 {offsets = [0, 1], sizes = [8, 1], strides = [1, 1]} : vector<8x4xf32> to vector<8x1xf32>
    %8 = vector.extract_strided_slice %1 {offsets = [1, 0], sizes = [1, 256], strides = [1, 1]} : vector<4x256xf32> to vector<1x256xf32>
    %9 = vector.broadcast %7 : vector<8x1xf32> to vector<8x256xf32>
    %10 = vector.broadcast %8 : vector<1x256xf32> to vector<8x256xf32>
    %11 = arith.mulf %9, %10 : vector<8x256xf32>
    %12 = arith.addf %6, %11 : vector<8x256xf32>
    %13 = vector.extract_strided_slice %0 {offsets = [0, 2], sizes = [8, 1], strides = [1, 1]} : vector<8x4xf32> to vector<8x1xf32>
    %14 = vector.extract_strided_slice %1 {offsets = [2, 0], sizes = [1, 256], strides = [1, 1]} : vector<4x256xf32> to vector<1x256xf32>
    %15 = vector.broadcast %13 : vector<8x1xf32> to vector<8x256xf32>
    %16 = vector.broadcast %14 : vector<1x256xf32> to vector<8x256xf32>
    %17 = arith.mulf %15, %16 : vector<8x256xf32>
    %18 = arith.addf %12, %17 : vector<8x256xf32>
    %19 = vector.extract_strided_slice %0 {offsets = [0, 3], sizes = [8, 1], strides = [1, 1]} : vector<8x4xf32> to vector<8x1xf32>
    %20 = vector.extract_strided_slice %1 {offsets = [3, 0], sizes = [1, 256], strides = [1, 1]} : vector<4x256xf32> to vector<1x256xf32>
    %21 = vector.broadcast %19 : vector<8x1xf32> to vector<8x256xf32>
    %22 = vector.broadcast %20 : vector<1x256xf32> to vector<8x256xf32>
    %23 = arith.mulf %21, %22 : vector<8x256xf32>
    %24 = arith.addf %18, %23 : vector<8x256xf32>
    %c0_3 = arith.constant 0 : index
    %c0_4 = arith.constant 0 : index
    %25 = vector.load %arg3[%c0_3, %c0_4] : memref<1x256xf32, #tpu.memory_space<vmem>>, vector<1x256xf32>
    %26 = vector.broadcast %25 : vector<1x256xf32> to vector<8x256xf32>
    %27 = arith.addf %24, %26 : vector<8x256xf32>
    %cst = arith.constant 0.000000e+00 : f32
    %28 = vector.broadcast %cst : f32 to vector<8x256xf32>
    %29 = arith.maximumf %27, %28 : vector<8x256xf32>
    %30 = arith.truncf %29 : vector<8x256xf32> to vector<8x256xbf16>
    %c0_5 = arith.constant 0 : index
    %c0_6 = arith.constant 0 : index
    %31 = vector.load %arg4[%c0_5, %c0_6] : memref<256x128xbf16, #tpu.memory_space<vmem>>, vector<256x128xbf16>
    %cst_7 = arith.constant dense<0.000000e+00> : vector<8x128xf32>
    %32 = tpu.matmul %30, %31, %cst_7 {dimension_numbers = #tpu.dot_dimension_numbers<[1], [0], [0], [1], [0, 0, 1, 1], [], []>} : vector<8x256xbf16>, vector<256x128xbf16>, vector<8x128xf32> -> vector<8x128xf32>
    %c0_8 = arith.constant 0 : index
    %c0_9 = arith.constant 0 : index
    %33 = vector.load %arg5[%c0_8, %c0_9] : memref<1x128xf32, #tpu.memory_space<vmem>>, vector<1x128xf32>
    %34 = vector.broadcast %33 : vector<1x128xf32> to vector<8x128xf32>
    %35 = arith.addf %32, %34 : vector<8x128xf32>
    %cst_10 = arith.constant 0.000000e+00 : f32
    %36 = vector.broadcast %cst_10 : f32 to vector<8x128xf32>
    %37 = arith.maximumf %35, %36 : vector<8x128xf32>
    %38 = arith.truncf %37 : vector<8x128xf32> to vector<8x128xbf16>
    %c0_11 = arith.constant 0 : index
    %c0_12 = arith.constant 0 : index
    %39 = vector.load %arg6[%c0_11, %c0_12] : memref<128x128xbf16, #tpu.memory_space<vmem>>, vector<128x128xbf16>
    %cst_13 = arith.constant dense<0.000000e+00> : vector<8x128xf32>
    %40 = tpu.matmul %38, %39, %cst_13 {dimension_numbers = #tpu.dot_dimension_numbers<[1], [0], [0], [1], [0, 0, 1, 1], [], []>} : vector<8x128xbf16>, vector<128x128xbf16>, vector<8x128xf32> -> vector<8x128xf32>
    %c0_14 = arith.constant 0 : index
    %c0_15 = arith.constant 0 : index
    %41 = vector.load %arg7[%c0_14, %c0_15] : memref<1x128xf32, #tpu.memory_space<vmem>>, vector<1x128xf32>
    %42 = vector.broadcast %41 : vector<1x128xf32> to vector<8x128xf32>
    %43 = arith.addf %40, %42 : vector<8x128xf32>
    %cst_16 = arith.constant 0.000000e+00 : f32
    %44 = vector.broadcast %cst_16 : f32 to vector<8x128xf32>
    %45 = arith.maximumf %43, %44 : vector<8x128xf32>
    %46 = arith.truncf %45 : vector<8x128xf32> to vector<8x128xbf16>
    %c0_17 = arith.constant 0 : index
    %c0_18 = arith.constant 0 : index
    %47 = vector.load %arg8[%c0_17, %c0_18] : memref<128x128xbf16, #tpu.memory_space<vmem>>, vector<128x128xbf16>
    %cst_19 = arith.constant dense<0.000000e+00> : vector<8x128xf32>
    %48 = tpu.matmul %46, %47, %cst_19 {dimension_numbers = #tpu.dot_dimension_numbers<[1], [0], [0], [1], [0, 0, 1, 1], [], []>} : vector<8x128xbf16>, vector<128x128xbf16>, vector<8x128xf32> -> vector<8x128xf32>
    %c0_20 = arith.constant 0 : index
    %c0_21 = arith.constant 0 : index
    %49 = vector.load %arg9[%c0_20, %c0_21] : memref<1x128xf32, #tpu.memory_space<vmem>>, vector<1x128xf32>
    %50 = vector.broadcast %49 : vector<1x128xf32> to vector<8x128xf32>
    %51 = arith.addf %48, %50 : vector<8x128xf32>
    %c0_22 = arith.constant 0 : index
    %c0_23 = arith.constant 0 : index
    %52 = vector.load %arg10[%c0_22, %c0_23] : memref<8x128xf32, #tpu.memory_space<vmem>>, vector<8x128xf32>
    tpu.vector_store %arg10[%c0_22, %c0_23], %51 {strides = array<i32>} : memref<8x128xf32, #tpu.memory_space<vmem>>, vector<8x128xf32>,
    return
  }
  func.func @transform_0(%arg0: i32) -> (i32, i32) {
    %c0_i32 = arith.constant 0 : i32
    %c0_i32_0 = arith.constant 0 : i32
    return %arg0, %c0_i32 : i32, i32
  }
  func.func @transform_1(%arg0: i32) -> (i32, i32) {
    %c0_i32 = arith.constant 0 : i32
    %c0_i32_0 = arith.constant 0 : i32
    %c0_i32_1 = arith.constant 0 : i32
    return %c0_i32, %c0_i32_0 : i32, i32
  }
  func.func @transform_2(%arg0: i32) -> (i32, i32) {
    %c0_i32 = arith.constant 0 : i32
    %c0_i32_0 = arith.constant 0 : i32
    %c0_i32_1 = arith.constant 0 : i32
    return %c0_i32, %c0_i32_0 : i32, i32
  }
  func.func @transform_3(%arg0: i32) -> (i32, i32) {
    %c0_i32 = arith.constant 0 : i32
    %c0_i32_0 = arith.constant 0 : i32
    %c0_i32_1 = arith.constant 0 : i32
    return %c0_i32, %c0_i32_0 : i32, i32
  }
  func.func @transform_4(%arg0: i32) -> (i32, i32) {
    %c0_i32 = arith.constant 0 : i32
    %c0_i32_0 = arith.constant 0 : i32
    %c0_i32_1 = arith.constant 0 : i32
    return %c0_i32, %c0_i32_0 : i32, i32
  }
  func.func @transform_5(%arg0: i32) -> (i32, i32) {
    %c0_i32 = arith.constant 0 : i32
    %c0_i32_0 = arith.constant 0 : i32
    %c0_i32_1 = arith.constant 0 : i32
    return %c0_i32, %c0_i32_0 : i32, i32
  }
  func.func @transform_6(%arg0: i32) -> (i32, i32) {
    %c0_i32 = arith.constant 0 : i32
    %c0_i32_0 = arith.constant 0 : i32
    %c0_i32_1 = arith.constant 0 : i32
    return %c0_i32, %c0_i32_0 : i32, i32
  }
  func.func @transform_7(%arg0: i32) -> (i32, i32) {
    %c0_i32 = arith.constant 0 : i32
    %c0_i32_0 = arith.constant 0 : i32
    %c0_i32_1 = arith.constant 0 : i32
    return %c0_i32, %c0_i32_0 : i32, i32
  }
  func.func @transform_8(%arg0: i32) -> (i32, i32) {
    %c0_i32 = arith.constant 0 : i32
    %c0_i32_0 = arith.constant 0 : i32
    %c0_i32_1 = arith.constant 0 : i32
    return %c0_i32, %c0_i32_0 : i32, i32
  }
  func.func @transform_9(%arg0: i32) -> (i32, i32) {
    %c0_i32 = arith.constant 0 : i32
    %c0_i32_0 = arith.constant 0 : i32
    return %arg0, %c0_i32 : i32, i32
  }
}

</mosaic_0001>

<llo_original>
// kernel: tpu_custom_call.1
$region0: #{tpu_custom_call.1}
  #allocation0 [shape = 'u32[]', space=smem, size = 0x4, offset = 0x4, fixed_abs, tag = 'smem constant byte address 0x4 - core index']
  #allocation1 [shape = 'u32[144,128]{1,0:T(1,128)}', space=vmem, size = 0x12000, scoped, tag = 'internal scratch']
  %s0 = inlined_call_operand.vmem [shape: f32[8,4], index: 0, kind: input, shape index: {}]
  %s1 = inlined_call_operand.vmem [shape: f32[4,256], index: 1, kind: input, shape index: {}]
  %s2 = inlined_call_operand.vmem [shape: f32[1,256], index: 2, kind: input, shape index: {}]
  %s3 = inlined_call_operand.hbm [shape: bf16[256,128], index: 3, kind: input, shape index: {}]
  %s4 = inlined_call_operand.vmem [shape: f32[1,128], index: 4, kind: input, shape index: {}]
  %s5 = inlined_call_operand.hbm [shape: bf16[128,128], index: 5, kind: input, shape index: {}]
  %s6 = inlined_call_operand.vmem [shape: f32[1,128], index: 6, kind: input, shape index: {}]
  %s7 = inlined_call_operand.hbm [shape: bf16[128,128], index: 7, kind: input, shape index: {}]
  %s8 = inlined_call_operand.vmem [shape: f32[1,128], index: 8, kind: input, shape index: {}]
  %s9 = inlined_call_operand.hbm [shape: f32[8,128], index: 9, kind: output, shape index: {}]
  %s10 = sld [smem:[#allocation0]]
  $region58: #{tpu_custom_call.1} parent=0
    _
  %s12 = ssub.s32 1, %s10
  %s13 = scalar_select 0, %s12, %s10
  $region1: #{tpu_custom_call.1} parent=0
    #allocation2 [shape = 'u8[65536]{0}', space=vmem, size = 0x10000, scoped, tag = 'input window, operand 3, single buffered']
    #allocation3 [shape = 's32[1]{0}', space=sflag, size = 0x4, scoped, tag = 'scoped memory for tpu_custom_call.1']
    #allocation4 [shape = 's32[1]{0}', space=sflag, size = 0x4, scoped, tag = 'scoped memory for tpu_custom_call.1']
    #allocation5 [shape = 'u8[32768]{0}', space=vmem, size = 0x8000, scoped, tag = 'input window, operand 5, single buffered']
    #allocation6 [shape = 's32[1]{0}', space=sflag, size = 0x4, scoped, tag = 'scoped memory for tpu_custom_call.1']
    #allocation7 [shape = 'u8[32768]{0}', space=vmem, size = 0x8000, scoped, tag = 'input window, operand 7, single buffered']
    #allocation8 [shape = 'u8[4096]{0}', space=vmem, size = 0x1000, scoped, tag = 'output window, operand 0, single buffered']
    %14 = vsyncpa [#allocation3], 0
    %15 = vsyncpa [#allocation6], 0
    %16 = vsyncpa [#allocation4], 0
    // Predicated region
    $region2: #{tpu_custom_call.1} parent=1 // pred_check
      _
    $region3: #{tpu_custom_call.1} parent=1 // pred_check_branch
      %18 = sbr.rel (0) target = $region5
    $region4: #{tpu_custom_call.1} parent=1 // pred_region
      _
    $region5: #{tpu_custom_call.1} parent=1 // pred_fallthru
      _
    // Predicated region
    $region6: #{tpu_custom_call.1} parent=1 // pred_check
      _
    $region7: #{tpu_custom_call.1} parent=1 // pred_check_branch
      %20 = sbr.rel (0) target = $region9
    $region8: #{tpu_custom_call.1} parent=1 // pred_region
      _
    $region9: #{tpu_custom_call.1} parent=1 // pred_fallthru
      _
    // Predicated region
    $region10: #{tpu_custom_call.1} parent=1 // pred_check
      _
    $region11: #{tpu_custom_call.1} parent=1 // pred_check_branch
      %22 = sbr.rel (0) target = $region13
    $region12: #{tpu_custom_call.1} parent=1 // pred_region
      _
    $region13: #{tpu_custom_call.1} parent=1 // pred_fallthru
      _
    // Predicated region
    $region14: #{tpu_custom_call.1} parent=1 // pred_check
      _
    $region15: #{tpu_custom_call.1} parent=1 // pred_check_branch
      %24 = sbr.rel (0) target = $region17
    $region16: #{tpu_custom_call.1} parent=1 // pred_region
      %s26 = ssub.s32 2048, 2048
      %27 = vsyncadd [#allocation3], %s26
      %s28 = sshll.u32 [#allocation2], 4
      %s29 = int_to_ptr.vmem [resolvable:$true] %s28
      %34 = dma.hbm_to_vmem [thread:$0]  %s3, 2048, %s29, [#allocation3], 64, 64, 4
    $region17: #{tpu_custom_call.1} parent=1 // pred_fallthru
      _
    // Predicated region
    $region18: #{tpu_custom_call.1} parent=1 // pred_check
      _
    $region19: #{tpu_custom_call.1} parent=1 // pred_check_branch
      %36 = sbr.rel (0) target = $region21
    $region20: #{tpu_custom_call.1} parent=1 // pred_region
      _
    $region21: #{tpu_custom_call.1} parent=1 // pred_fallthru
      _
    // Predicated region
    $region22: #{tpu_custom_call.1} parent=1 // pred_check
      _
    $region23: #{tpu_custom_call.1} parent=1 // pred_check_branch
      %38 = sbr.rel (0) target = $region25
    $region24: #{tpu_custom_call.1} parent=1 // pred_region
      %s40 = ssub.s32 1024, 1024
      %41 = vsyncadd [#allocation6], %s40
      %s42 = sshll.u32 [#allocation5], 4
      %s43 = int_to_ptr.vmem [resolvable:$true] %s42
      %48 = dma.hbm_to_vmem [thread:$0]  %s5, 1024, %s43, [#allocation6], 64, 64, 4
    $region25: #{tpu_custom_call.1} parent=1 // pred_fallthru
      _
    // Predicated region
    $region26: #{tpu_custom_call.1} parent=1 // pred_check
      _
    $region27: #{tpu_custom_call.1} parent=1 // pred_check_branch
      %50 = sbr.rel (0) target = $region29
    $region28: #{tpu_custom_call.1} parent=1 // pred_region
      _
    $region29: #{tpu_custom_call.1} parent=1 // pred_fallthru
      _
    // Predicated region
    $region30: #{tpu_custom_call.1} parent=1 // pred_check
      _
    $region31: #{tpu_custom_call.1} parent=1 // pred_check_branch
      %52 = sbr.rel (0) target = $region33
    $region32: #{tpu_custom_call.1} parent=1 // pred_region
      %s54 = ssub.s32 1024, 1024
      %55 = vsyncadd [#allocation6], %s54
      %s56 = sshll.u32 [#allocation7], 4
      %s57 = int_to_ptr.vmem [resolvable:$true] %s56
      %62 = dma.hbm_to_vmem [thread:$0]  %s7, 1024, %s57, [#allocation6], 64, 64, 4
    $region33: #{tpu_custom_call.1} parent=1 // pred_fallthru
      _
    // Predicated region
    $region34: #{tpu_custom_call.1} parent=1 // pred_check
      _
    $region35: #{tpu_custom_call.1} parent=1 // pred_check_branch
      %64 = sbr.rel (0) target = $region37
    $region36: #{tpu_custom_call.1} parent=1 // pred_region
      _
    $region37: #{tpu_custom_call.1} parent=1 // pred_fallthru
      _
    // Predicated region
    $region38: #{tpu_custom_call.1} parent=1 // pred_check
      _
    $region39: #{tpu_custom_call.1} parent=1 // pred_check_branch
      %66 = sbr.rel (0) target = $region41
    $region40: #{tpu_custom_call.1} parent=1 // pred_region
      %67 = dma.done [#allocation3], 2048
    $region41: #{tpu_custom_call.1} parent=1 // pred_fallthru
      _
    // Predicated region
    $region42: #{tpu_custom_call.1} parent=1 // pred_check
      _
    $region43: #{tpu_custom_call.1} parent=1 // pred_check_branch
      %69 = sbr.rel (0) target = $region45
    $region44: #{tpu_custom_call.1} parent=1 // pred_region
      %70 = dma.done [#allocation6], 1024
    $region45: #{tpu_custom_call.1} parent=1 // pred_fallthru
      _
    // Predicated region
    $region46: #{tpu_custom_call.1} parent=1 // pred_check
      _
    $region47: #{tpu_custom_call.1} parent=1 // pred_check_branch
      %72 = sbr.rel (0) target = $region49
    $region48: #{tpu_custom_call.1} parent=1 // pred_region
      %73 = dma.done [#allocation6], 1024
    $region49: #{tpu_custom_call.1} parent=1 // pred_fallthru
      _
    %v75 = vld [vmem:[%s0] sm:$0xff]
    %v76 = vld [vmem:[%s1] sm:$0xff]
    %78 = vset.pattern.permute.xlu0 0
    %79 = vperm.xlu0 %78, %v75
    %v80 = vpop.permute.xlu0 %79
    %v83 = vlaneseq
    %v84 = vshrl.u32 %v83, 7
    %v85 = vsub.s32 0, %v84
    %v86 = vrot.slane %v76, %v85
    %v87 = vlaneseq
    %v88 = vshrl.u32 %v87, 7
    %v89 = vsub.s32 4, %v88
    %v90 = vrot.slane %v76, %v89
    %v93 = vlaneseq
    %v94 = vshrl.u32 %v93, 7
    %v95 = vsub.s32 0, %v94
    %v96 = vrot.slane %v86, %v95
    %v97 = vlaneseq
    %v98 = vshrl.u32 %v97, 7
    %v99 = vsub.s32 0, %v98
    %v100 = vrot.slane %v90, %v99
    %v101 = vmul.f32 %v80, %v96
    %v102 = vmul.f32 %v80, %v100
    %103 = vset.pattern.permute.xlu0 1
    %104 = vperm.xlu0 %103, %v75
    %v105 = vpop.permute.xlu0 %104
    %v107 = vlaneseq
    %v108 = vshrl.u32 %v107, 7
    %v109 = vsub.s32 1, %v108
    %v110 = vrot.slane %v76, %v109
    %v111 = vlaneseq
    %v112 = vshrl.u32 %v111, 7
    %v113 = vsub.s32 5, %v112
    %v114 = vrot.slane %v76, %v113
    %v117 = vlaneseq
    %v118 = vshrl.u32 %v117, 7
    %v119 = vsub.s32 1, %v118
    %v120 = vrot.slane %v110, %v119
    %v121 = vlaneseq
    %v122 = vshrl.u32 %v121, 7
    %v123 = vsub.s32 1, %v122
    %v124 = vrot.slane %v114, %v123
    %v125 = vmul.f32 %v105, %v120
    %v126 = vmul.f32 %v105, %v124
    %v127 = vadd.f32 %v101, %v125
    %v128 = vadd.f32 %v102, %v126
    %129 = vset.pattern.permute.xlu0 2
    %130 = vperm.xlu0 %129, %v75
    %v131 = vpop.permute.xlu0 %130
    %v133 = vlaneseq
    %v134 = vshrl.u32 %v133, 7
    %v135 = vsub.s32 2, %v134
    %v136 = vrot.slane %v76, %v135
    %v137 = vlaneseq
    %v138 = vshrl.u32 %v137, 7
    %v139 = vsub.s32 6, %v138
    %v140 = vrot.slane %v76, %v139
    %v143 = vlaneseq
    %v144 = vshrl.u32 %v143, 7
    %v145 = vsub.s32 2, %v144
    %v146 = vrot.slane %v136, %v145
    %v147 = vlaneseq
    %v148 = vshrl.u32 %v147, 7
    %v149 = vsub.s32 2, %v148
    %v150 = vrot.slane %v140, %v149
    %v151 = vmul.f32 %v131, %v146
    %v152 = vmul.f32 %v131, %v150
    %v153 = vadd.f32 %v127, %v151
    %v154 = vadd.f32 %v128, %v152
    %155 = vset.pattern.permute.xlu0 3
    %156 = vperm.xlu0 %155, %v75
    %v157 = vpop.permute.xlu0 %156
    %v159 = vlaneseq
    %v160 = vshrl.u32 %v159, 7
    %v161 = vsub.s32 3, %v160
    %v162 = vrot.slane %v76, %v161
    %v163 = vlaneseq
    %v164 = vshrl.u32 %v163, 7
    %v165 = vsub.s32 7, %v164
    %v166 = vrot.slane %v76, %v165
    %v169 = vlaneseq
    %v170 = vshrl.u32 %v169, 7
    %v171 = vsub.s32 3, %v170
    %v172 = vrot.slane %v162, %v171
    %v173 = vlaneseq
    %v174 = vshrl.u32 %v173, 7
    %v175 = vsub.s32 3, %v174
    %v176 = vrot.slane %v166, %v175
    %v177 = vmul.f32 %v157, %v172
    %v178 = vmul.f32 %v157, %v176
    %v179 = vadd.f32 %v153, %v177
    %v180 = vadd.f32 %v154, %v178
    %v181 = vld [vmem:[%s2] sm:$0x3]
    %v183 = vlaneseq
    %v184 = vshrl.u32 %v183, 7
    %v185 = vsub.s32 0, %v184
    %v186 = vrot.slane %v181, %v185
    %v187 = vlaneseq
    %v188 = vshrl.u32 %v187, 7
    %v189 = vsub.s32 1, %v188
    %v190 = vrot.slane %v181, %v189
    %v193 = vadd.f32 %v179, %v186
    %v194 = vadd.f32 %v180, %v190
    %v195 = vmax.f32 %v193, 0.0
    %v196 = vmax.f32 %v194, 0.0
    %v197 = vpack.c.bf16 %v195, %v195
    %v198 = vpack.c.bf16 %v196, %v196
    %v199 = vld [vmem:[#allocation2] sm:$0xf]
    %v200 = vld [vmem:[#allocation2 + $0x4] sm:$0xf]
    %v201 = vld [vmem:[#allocation2 + $0x8] sm:$0xf]
    %v202 = vld [vmem:[#allocation2 + $0xc] sm:$0xf]
    %v203 = vld [vmem:[#allocation2 + $0x10] sm:$0xf]
    %v204 = vld [vmem:[#allocation2 + $0x14] sm:$0xf]
    %v205 = vld [vmem:[#allocation2 + $0x18] sm:$0xf]
    %v206 = vld [vmem:[#allocation2 + $0x1c] sm:$0xf]
    %v207 = vld [vmem:[#allocation2 + $0x20] sm:$0xf]
    %v208 = vld [vmem:[#allocation2 + $0x24] sm:$0xf]
    %v209 = vld [vmem:[#allocation2 + $0x28] sm:$0xf]
    %v210 = vld [vmem:[#allocation2 + $0x2c] sm:$0xf]
    %v211 = vld [vmem:[#allocation2 + $0x30] sm:$0xf]
    %v212 = vld [vmem:[#allocation2 + $0x34] sm:$0xf]
    %v213 = vld [vmem:[#allocation2 + $0x38] sm:$0xf]
    %v214 = vld [vmem:[#allocation2 + $0x3c] sm:$0xf]
    %v215 = vld [vmem:[#allocation2 + $0x40] sm:$0xf]
    %v216 = vld [vmem:[#allocation2 + $0x44] sm:$0xf]
    %v217 = vld [vmem:[#allocation2 + $0x48] sm:$0xf]
    %v218 = vld [vmem:[#allocation2 + $0x4c] sm:$0xf]
    %v219 = vld [vmem:[#allocation2 + $0x50] sm:$0xf]
    %v220 = vld [vmem:[#allocation2 + $0x54] sm:$0xf]
    %v221 = vld [vmem:[#allocation2 + $0x58] sm:$0xf]
    %v222 = vld [vmem:[#allocation2 + $0x5c] sm:$0xf]
    %v223 = vld [vmem:[#allocation2 + $0x60] sm:$0xf]
    %v224 = vld [vmem:[#allocation2 + $0x64] sm:$0xf]
    %v225 = vld [vmem:[#allocation2 + $0x68] sm:$0xf]
    %v226 = vld [vmem:[#allocation2 + $0x6c] sm:$0xf]
    %v227 = vld [vmem:[#allocation2 + $0x70] sm:$0xf]
    %v228 = vld [vmem:[#allocation2 + $0x74] sm:$0xf]
    %v229 = vld [vmem:[#allocation2 + $0x78] sm:$0xf]
    %v230 = vld [vmem:[#allocation2 + $0x7c] sm:$0xf]
    %v231 = vld [vmem:[%s4] sm:$0x1]
    %v233 = vlaneseq
    %v234 = vshrl.u32 %v233, 7
    %v235 = vsub.s32 0, %v234
    %v236 = vrot.slane %v231, %v235
    %v270 = vunpack.c.l.b16 %v199
    %v271 = vunpack.c.l.b16 %v200
    %v272 = vunpack.c.l.b16 %v201
    %v273 = vunpack.c.l.b16 %v202
    %v274 = vunpack.c.l.b16 %v203
    %v275 = vunpack.c.l.b16 %v204
    %v276 = vunpack.c.l.b16 %v205
    %v277 = vunpack.c.l.b16 %v206
    %v278 = vunpack.c.l.b16 %v207
    %v279 = vunpack.c.l.b16 %v208
    %v280 = vunpack.c.l.b16 %v209
    %v281 = vunpack.c.l.b16 %v210
    %v282 = vunpack.c.l.b16 %v211
    %v283 = vunpack.c.l.b16 %v212
    %v284 = vunpack.c.l.b16 %v213
    %v285 = vunpack.c.l.b16 %v214
    %v286 = vunpack.c.l.b16 %v215
    %v287 = vunpack.c.l.b16 %v216
    %v288 = vunpack.c.l.b16 %v217
    %v289 = vunpack.c.l.b16 %v218
    %v290 = vunpack.c.l.b16 %v219
    %v291 = vunpack.c.l.b16 %v220
    %v292 = vunpack.c.l.b16 %v221
    %v293 = vunpack.c.l.b16 %v222
    %v294 = vunpack.c.l.b16 %v223
    %v295 = vunpack.c.l.b16 %v224
    %v296 = vunpack.c.l.b16 %v225
    %v297 = vunpack.c.l.b16 %v226
    %v298 = vunpack.c.l.b16 %v227
    %v299 = vunpack.c.l.b16 %v228
    %v300 = vunpack.c.l.b16 %v229
    %v301 = vunpack.c.l.b16 %v230
    %v302 = vpack.c.b16 %v271, %v270
    %v303 = vpack.c.b16 %v273, %v272
    %v304 = vpack.c.b16 %v275, %v274
    %v305 = vpack.c.b16 %v277, %v276
    %v306 = vpack.c.b16 %v279, %v278
    %v307 = vpack.c.b16 %v281, %v280
    %v308 = vpack.c.b16 %v283, %v282
    %v309 = vpack.c.b16 %v285, %v284
    %v310 = vpack.c.b16 %v287, %v286
    %v311 = vpack.c.b16 %v289, %v288
    %v312 = vpack.c.b16 %v291, %v290
    %v313 = vpack.c.b16 %v293, %v292
    %v314 = vpack.c.b16 %v295, %v294
    %v315 = vpack.c.b16 %v297, %v296
    %v316 = vpack.c.b16 %v299, %v298
    %v317 = vpack.c.b16 %v301, %v300
    %334 = vmatprep.subr.bf16.mxu0 0
    %335 = vmatpush1.bf16.msra.mxu0 %v302
    %336 = vmatprep.subr.bf16.mxu0 0
    %337 = vmatpush1.bf16.msra.mxu0 %v303
    %338 = vmatprep.subr.bf16.mxu0 0
    %339 = vmatpush1.bf16.msra.mxu0 %v304
    %340 = vmatprep.subr.bf16.mxu0 0
    %341 = vmatpush1.bf16.msra.mxu0 %v305
    %342 = vmatprep.subr.bf16.mxu0 0
    %343 = vmatpush1.bf16.msra.mxu0 %v306
    %344 = vmatprep.subr.bf16.mxu0 0
    %345 = vmatpush1.bf16.msra.mxu0 %v307
    %346 = vmatprep.subr.bf16.mxu0 0
    %347 = vmatpush1.bf16.msra.mxu0 %v308
    %348 = vmatprep.subr.bf16.mxu0 0
    %349 = vmatpush1.bf16.msra.mxu0 %v309
    %350 = vmatprep.subr.bf16.mxu0 0
    %351 = vmatpush1.bf16.msra.mxu0 %v310
    %352 = vmatprep.subr.bf16.mxu0 0
    %353 = vmatpush1.bf16.msra.mxu0 %v311
    %354 = vmatprep.subr.bf16.mxu0 0
    %355 = vmatpush1.bf16.msra.mxu0 %v312
    %356 = vmatprep.subr.bf16.mxu0 0
    %357 = vmatpush1.bf16.msra.mxu0 %v313
    %358 = vmatprep.subr.bf16.mxu0 0
    %359 = vmatpush1.bf16.msra.mxu0 %v314
    %360 = vmatprep.subr.bf16.mxu0 0
    %361 = vmatpush1.bf16.msra.mxu0 %v315
    %362 = vmatprep.subr.bf16.mxu0 0
    %363 = vmatpush1.bf16.msra.mxu0 %v316
    %364 = vmatprep.subr.bf16.mxu0 0
    %365 = vmatpush1.bf16.msra.mxu0 %v317
    %366 = vmatprep.mubr.bf16.mxu0 %v198
    %367 = vmatmul.mubr.bf16.gmra.mrb[0].mxu0 %v197
    %v368 = vpop.f32.mrb[0].mxu0
    %v369 = vadd.f32 %v236, %v368
    %v370 = vpop.f32.mrb[0].mxu0
    %v371 = vpop.f32.mrb[0].mxu0
    %v372 = vpop.f32.mrb[0].mxu0
    %373 = vdwg.mxu0
    %v374 = vmax.f32 %v369, 0.0
    %v375 = vpack.c.bf16 %v374, %v374
    %v376 = vld [vmem:[#allocation5] sm:$0xf]
    %v377 = vld [vmem:[#allocation5 + $0x4] sm:$0xf]
    %v378 = vld [vmem:[#allocation5 + $0x8] sm:$0xf]
    %v379 = vld [vmem:[#allocation5 + $0xc] sm:$0xf]
    %v380 = vld [vmem:[#allocation5 + $0x10] sm:$0xf]
    %v381 = vld [vmem:[#allocation5 + $0x14] sm:$0xf]
    %v382 = vld [vmem:[#allocation5 + $0x18] sm:$0xf]
    %v383 = vld [vmem:[#allocation5 + $0x1c] sm:$0xf]
    %v384 = vld [vmem:[#allocation5 + $0x20] sm:$0xf]
    %v385 = vld [vmem:[#allocation5 + $0x24] sm:$0xf]
    %v386 = vld [vmem:[#allocation5 + $0x28] sm:$0xf]
    %v387 = vld [vmem:[#allocation5 + $0x2c] sm:$0xf]
    %v388 = vld [vmem:[#allocation5 + $0x30] sm:$0xf]
    %v389 = vld [vmem:[#allocation5 + $0x34] sm:$0xf]
    %v390 = vld [vmem:[#allocation5 + $0x38] sm:$0xf]
    %v391 = vld [vmem:[#allocation5 + $0x3c] sm:$0xf]
    %v392 = vld [vmem:[%s6] sm:$0x1]
    %v394 = vlaneseq
    %v395 = vshrl.u32 %v394, 7
    %v396 = vsub.s32 0, %v395
    %v397 = vrot.slane %v392, %v396
    %v415 = vunpack.c.l.b16 %v376
    %v416 = vunpack.c.l.b16 %v377
    %v417 = vunpack.c.l.b16 %v378
    %v418 = vunpack.c.l.b16 %v379
    %v419 = vunpack.c.l.b16 %v380
    %v420 = vunpack.c.l.b16 %v381
    %v421 = vunpack.c.l.b16 %v382
    %v422 = vunpack.c.l.b16 %v383
    %v423 = vunpack.c.l.b16 %v384
    %v424 = vunpack.c.l.b16 %v385
    %v425 = vunpack.c.l.b16 %v386
    %v426 = vunpack.c.l.b16 %v387
    %v427 = vunpack.c.l.b16 %v388
    %v428 = vunpack.c.l.b16 %v389
    %v429 = vunpack.c.l.b16 %v390
    %v430 = vunpack.c.l.b16 %v391
    %v431 = vpack.c.b16 %v416, %v415
    %v432 = vpack.c.b16 %v418, %v417
    %v433 = vpack.c.b16 %v420, %v419
    %v434 = vpack.c.b16 %v422, %v421
    %v435 = vpack.c.b16 %v424, %v423
    %v436 = vpack.c.b16 %v426, %v425
    %v437 = vpack.c.b16 %v428, %v427
    %v438 = vpack.c.b16 %v430, %v429
    %447 = vmatprep.subr.bf16.mxu0 0
    %448 = vmatpush1.bf16.msra.mxu0 %v431
    %449 = vmatprep.subr.bf16.mxu0 0
    %450 = vmatpush1.bf16.msra.mxu0 %v432
    %451 = vmatprep.subr.bf16.mxu0 0
    %452 = vmatpush1.bf16.msra.mxu0 %v433
    %453 = vmatprep.subr.bf16.mxu0 0
    %454 = vmatpush1.bf16.msra.mxu0 %v434
    %455 = vmatprep.subr.bf16.mxu0 0
    %456 = vmatpush1.bf16.msra.mxu0 %v435
    %457 = vmatprep.subr.bf16.mxu0 0
    %458 = vmatpush1.bf16.msra.mxu0 %v436
    %459 = vmatprep.subr.bf16.mxu0 0
    %460 = vmatpush1.bf16.msra.mxu0 %v437
    %461 = vmatprep.subr.bf16.mxu0 0
    %462 = vmatpush1.bf16.msra.mxu0 %v438
    %463 = vmatprep.subr.bf16.mxu0 0
    %464 = vmatpush1.bf16.msra.mxu0 0
    %465 = vmatprep.subr.bf16.mxu0 0
    %466 = vmatpush1.bf16.msra.mxu0 0
    %467 = vmatprep.subr.bf16.mxu0 0
    %468 = vmatpush1.bf16.msra.mxu0 0
    %469 = vmatprep.subr.bf16.mxu0 0
    %470 = vmatpush1.bf16.msra.mxu0 0
    %471 = vmatprep.subr.bf16.mxu0 0
    %472 = vmatpush1.bf16.msra.mxu0 0
    %473 = vmatprep.subr.bf16.mxu0 0
    %474 = vmatpush1.bf16.msra.mxu0 0
    %475 = vmatprep.subr.bf16.mxu0 0
    %476 = vmatpush1.bf16.msra.mxu0 0
    %477 = vmatprep.subr.bf16.mxu0 0
    %478 = vmatpush1.bf16.msra.mxu0 0
    %479 = vmatprep.mubr.bf16.mxu0 0
    %480 = vmatmul.mubr.bf16.gmra.mrb[0].mxu0 %v375
    %v481 = vpop.f32.mrb[0].mxu0
    %v482 = vadd.f32 %v397, %v481
    %v483 = vpop.f32.mrb[0].mxu0
    %v484 = vpop.f32.mrb[0].mxu0
    %v485 = vpop.f32.mrb[0].mxu0
    %486 = vdwg.mxu0
    %v487 = vmax.f32 %v482, 0.0
    %v488 = vpack.c.bf16 %v487, %v487
    %v489 = vld [vmem:[#allocation7] sm:$0xf]
    %v490 = vld [vmem:[#allocation7 + $0x4] sm:$0xf]
    %v491 = vld [vmem:[#allocation7 + $0x8] sm:$0xf]
    %v492 = vld [vmem:[#allocation7 + $0xc] sm:$0xf]
    %v493 = vld [vmem:[#allocation7 + $0x10] sm:$0xf]
    %v494 = vld [vmem:[#allocation7 + $0x14] sm:$0xf]
    %v495 = vld [vmem:[#allocation7 + $0x18] sm:$0xf]
    %v496 = vld [vmem:[#allocation7 + $0x1c] sm:$0xf]
    %v497 = vld [vmem:[#allocation7 + $0x20] sm:$0xf]
    %v498 = vld [vmem:[#allocation7 + $0x24] sm:$0xf]
    %v499 = vld [vmem:[#allocation7 + $0x28] sm:$0xf]
    %v500 = vld [vmem:[#allocation7 + $0x2c] sm:$0xf]
    %v501 = vld [vmem:[#allocation7 + $0x30] sm:$0xf]
    %v502 = vld [vmem:[#allocation7 + $0x34] sm:$0xf]
    %v503 = vld [vmem:[#allocation7 + $0x38] sm:$0xf]
    %v504 = vld [vmem:[#allocation7 + $0x3c] sm:$0xf]
    %v505 = vld [vmem:[%s8] sm:$0x1]
    %v507 = vlaneseq
    %v508 = vshrl.u32 %v507, 7
    %v509 = vsub.s32 0, %v508
    %v510 = vrot.slane %v505, %v509
    %v528 = vunpack.c.l.b16 %v489
    %v529 = vunpack.c.l.b16 %v490
    %v530 = vunpack.c.l.b16 %v491
    %v531 = vunpack.c.l.b16 %v492
    %v532 = vunpack.c.l.b16 %v493
    %v533 = vunpack.c.l.b16 %v494
    %v534 = vunpack.c.l.b16 %v495
    %v535 = vunpack.c.l.b16 %v496
    %v536 = vunpack.c.l.b16 %v497
    %v537 = vunpack.c.l.b16 %v498
    %v538 = vunpack.c.l.b16 %v499
    %v539 = vunpack.c.l.b16 %v500
    %v540 = vunpack.c.l.b16 %v501
    %v541 = vunpack.c.l.b16 %v502
    %v542 = vunpack.c.l.b16 %v503
    %v543 = vunpack.c.l.b16 %v504
    %v544 = vpack.c.b16 %v529, %v528
    %v545 = vpack.c.b16 %v531, %v530
    %v546 = vpack.c.b16 %v533, %v532
    %v547 = vpack.c.b16 %v535, %v534
    %v548 = vpack.c.b16 %v537, %v536
    %v549 = vpack.c.b16 %v539, %v538
    %v550 = vpack.c.b16 %v541, %v540
    %v551 = vpack.c.b16 %v543, %v542
    %560 = vmatprep.subr.bf16.mxu0 0
    %561 = vmatpush1.bf16.msra.mxu0 %v544
    %562 = vmatprep.subr.bf16.mxu0 0
    %563 = vmatpush1.bf16.msra.mxu0 %v545
    %564 = vmatprep.subr.bf16.mxu0 0
    %565 = vmatpush1.bf16.msra.mxu0 %v546
    %566 = vmatprep.subr.bf16.mxu0 0
    %567 = vmatpush1.bf16.msra.mxu0 %v547
    %568 = vmatprep.subr.bf16.mxu0 0
    %569 = vmatpush1.bf16.msra.mxu0 %v548
    %570 = vmatprep.subr.bf16.mxu0 0
    %571 = vmatpush1.bf16.msra.mxu0 %v549
    %572 = vmatprep.subr.bf16.mxu0 0
    %573 = vmatpush1.bf16.msra.mxu0 %v550
    %574 = vmatprep.subr.bf16.mxu0 0
    %575 = vmatpush1.bf16.msra.mxu0 %v551
    %576 = vmatprep.subr.bf16.mxu0 0
    %577 = vmatpush1.bf16.msra.mxu0 0
    %578 = vmatprep.subr.bf16.mxu0 0
    %579 = vmatpush1.bf16.msra.mxu0 0
    %580 = vmatprep.subr.bf16.mxu0 0
    %581 = vmatpush1.bf16.msra.mxu0 0
    %582 = vmatprep.subr.bf16.mxu0 0
    %583 = vmatpush1.bf16.msra.mxu0 0
    %584 = vmatprep.subr.bf16.mxu0 0
    %585 = vmatpush1.bf16.msra.mxu0 0
    %586 = vmatprep.subr.bf16.mxu0 0
    %587 = vmatpush1.bf16.msra.mxu0 0
    %588 = vmatprep.subr.bf16.mxu0 0
    %589 = vmatpush1.bf16.msra.mxu0 0
    %590 = vmatprep.subr.bf16.mxu0 0
    %591 = vmatpush1.bf16.msra.mxu0 0
    %592 = vmatprep.mubr.bf16.mxu0 0
    %593 = vmatmul.mubr.bf16.gmra.mrb[0].mxu0 %v488
    %v594 = vpop.f32.mrb[0].mxu0
    %v595 = vadd.f32 %v510, %v594
    %v596 = vpop.f32.mrb[0].mxu0
    %v597 = vpop.f32.mrb[0].mxu0
    %v598 = vpop.f32.mrb[0].mxu0
    %599 = vdwg.mxu0
    %600 = vst [vmem:[#allocation8] sm:$0xff] %v595
    // Predicated region
    $region50: #{tpu_custom_call.1} parent=1 // pred_check
      _
    $region51: #{tpu_custom_call.1} parent=1 // pred_check_branch
      %602 = sbr.rel (0) target = $region53
    $region52: #{tpu_custom_call.1} parent=1 // pred_region
      %s604 = ssub.s32 128, 128
      %605 = vsyncadd [#allocation4], %s604
      %s607 = sshll.u32 [#allocation8], 4
      %s608 = int_to_ptr.vmem [resolvable:$true] %s607
      %610 = dma.vmem_to_hbm [thread:$0]  %s608, 128, %s9, [#allocation4]
    $region53: #{tpu_custom_call.1} parent=1 // pred_fallthru
      _
    // Predicated region
    $region54: #{tpu_custom_call.1} parent=1 // pred_check
      _
    $region55: #{tpu_custom_call.1} parent=1 // pred_check_branch
      %612 = sbr.rel (0) target = $region57
    $region56: #{tpu_custom_call.1} parent=1 // pred_region
      %613 = dma.done [#allocation4], 128
    $region57: #{tpu_custom_call.1} parent=1 // pred_fallthru
      _
    %614 = vsyncpa [#allocation3], 1
    %615 = vsyncpa [#allocation6], 1
    %616 = vsyncpa [#allocation4], 1

</llo_original>
